<compile_context>
chip_gen: v6e
topology: v6e:2x2x1
jax: 0.10.0
libtpu: 0.0.40
codegen_flags: <defaults>
</compile_context>

<pallas_src>
import functools

import jax
import jax.numpy as jnp
from jax.experimental import pallas as pl
from jax.experimental.pallas import tpu as pltpu

ALPHA = 0.25
GAMMA = 2.0          # gamma == 2 -> implemented as an explicit square below
W0, W1 = 1.0, 1.0    # BCEFocal2WayLoss(weights=[1, 1])

_NEG_LARGE = float(jnp.finfo(jnp.float32).min)   # padding value for the T axis


def _focal_sum(x, t):
    """Sum (not mean) of the BCE focal loss over all elements of x / t.

    One shared exp(-|x|) per element feeds both the softplus term and the
    sigmoid; the divide goes to the (approximate) EUP reciprocal slot.
    """
    x = x.astype(jnp.float32)
    t = t.astype(jnp.float32)
    e = jnp.exp(-jnp.abs(x))                       # shared EUP transcendental
    softplus = jnp.log(1.0 + e)                    # log(1 + exp(-|x|))
    bce = jnp.maximum(x, 0.0) - x * t + softplus   # BCEWithLogitsLoss(reduction='none')
    r = pl.reciprocal(1.0 + e, approx=True)        # EUP vrcp (separate slot)
    p = jnp.where(x >= 0.0, r, e * r)              # sigmoid(x), stable both signs
    one_m_p = 1.0 - p
    w = t * ALPHA * (one_m_p * one_m_p) + (1.0 - t) * (p * p)   # gamma == 2
    return jnp.sum(w * bce)


def _bce_focal_2way_kernel(logit_ref, target_ref, frame_ref, out_ref,
                           max_acc, loss0_acc, *, inv_n):
    t_idx = pl.program_id(0)
    n_t = pl.num_programs(0)

    @pl.when(t_idx == 0)
    def _init():
        # Running max over T, initialized to -inf.
        max_acc[...] = jnp.full_like(max_acc, -jnp.inf)
        # Logit-path focal loss is independent of `frame`: compute it now so
        # it overlaps with the frame-tile DMAs instead of adding to the tail.
        loss0_acc[0] = _focal_sum(logit_ref[...], target_ref[...])

    # Whole-tile max over the T axis folded into the running max (VPU compares,
    # stays off the DMA critical path).
    max_acc[...] = jnp.maximum(
        max_acc[...], jnp.max(frame_ref[...].astype(jnp.float32), axis=1))

    @pl.when(t_idx == n_t - 1)
    def _finalize():
        aux_sum = _focal_sum(max_acc[...], target_ref[...])
        out_ref[0, 0] = (W0 * loss0_acc[0] + W1 * aux_sum) * inv_n


def bce_focal_2way_loss(logit, framewise_logit, target, *, t_tile=None):
    """Pallas TPU forward of BCEFocal2WayLoss (weights=[1, 1])."""
    logit = logit.astype(jnp.float32)
    framewise_logit = framewise_logit.astype(jnp.float32)
    target = target.astype(jnp.float32)

    B, T, C = framewise_logit.shape
    assert logit.shape == (B, C) and target.shape == (B, C)

    # --- T-tile choice: ~2 MiB per tile (double-buffered ~4 MiB), multiple of
    # --- 8 so the (t_tile, C) trailing block dims obey the (8, 128) rule.
    if t_tile is None:
        bytes_per_t_row = B * C * 4
        rows = max(8, (2 * 1024 * 1024) // max(bytes_per_t_row, 1))
        t_tile = max(8, min((rows // 8) * 8, -(-T // 8) * 8))
    t_pad = -(-T // t_tile) * t_tile
    if t_pad != T:
        # Pad the reduced-over axis with a huge negative value: it never wins
        # the max and never reaches the focal math, so the mean stays /(B*C).
        pad = jnp.full((B, t_pad - T, C), _NEG_LARGE, dtype=jnp.float32)
        framewise_logit = jnp.concatenate([framewise_logit, pad], axis=1)
    num_t_blocks = t_pad // t_tile

    kernel = functools.partial(_bce_focal_2way_kernel,
                               inv_n=1.0 / float(B * C))

    out = pl.pallas_call(
        kernel,
        out_shape=jax.ShapeDtypeStruct((1, 1), jnp.float32),
        grid=(num_t_blocks,),
        in_specs=[
            # Small (B, C) operands stay resident in VMEM (constant block
            # index -> fetched once, no per-step re-DMA).
            pl.BlockSpec((B, C), lambda t: (0, 0)),
            pl.BlockSpec((B, C), lambda t: (0, 0)),
            # The big framewise tensor is tiled over T and auto-pipelined.
            pl.BlockSpec((B, t_tile, C), lambda t: (0, t, 0)),
        ],
        out_specs=pl.BlockSpec(memory_space=pltpu.MemorySpace.SMEM),
        scratch_shapes=[
            pltpu.VMEM((B, C), jnp.float32),     # running max over T
            pltpu.SMEM((1,), jnp.float32),       # logit-path focal partial sum
        ],
        compiler_params=pltpu.CompilerParams(
            # T is a reduction axis carried by the scratch accumulator.
            dimension_semantics=("arbitrary",),
            # Explicit, generation-portable VMEM budget (v5e default scoped is
            # 16 MiB, v7x physical is 64 MiB); our usage is ~2 tiles + epsilon.
            vmem_limit_bytes=32 * 1024 * 1024,
        ),
    )(logit, target, framewise_logit)
    # TODO(synk): for v7x megacore, emit per-T-block partial maxes on a
    # "parallel" grid axis and reduce in the wrapper (neutral on v5e/v6e).
    return out[0, 0]


def _reference(logit, framewise_logit, target):
    """Pure-JAX reference mirroring the PyTorch module."""
    def focal_mean(x, t):
        bce = jnp.maximum(x, 0.0) - x * t + jnp.log(1.0 + jnp.exp(-jnp.abs(x)))
        p = jax.nn.sigmoid(x)
        loss = (t * ALPHA * (1.0 - p) ** 2 * bce
                + (1.0 - t) * p ** 2 * bce)
        return jnp.mean(loss)
    clip_max = jnp.max(framewise_logit, axis=1)
    return W0 * focal_mean(logit, target) + W1 * focal_mean(clip_max, target)


if __name__ == "__main__":
    B, T, C = 2, 8, 32
    key = jax.random.PRNGKey(0)
    k1, k2, k3 = jax.random.split(key, 3)

    logit = jax.random.normal(k1, (B, C), dtype=jnp.float32) * 2.0
    framewise_logit = jax.random.normal(k2, (B, T, C), dtype=jnp.float32) * 2.0
    target = (jax.random.uniform(k3, (B, C)) > 0.7).astype(jnp.float32)

    out = bce_focal_2way_loss(logit, framewise_logit, target)
    out = jax.block_until_ready(out)

    ref = _reference(logit, framewise_logit, target)
    # Tolerance accommodates the EUP approximate reciprocal used inside the
    # kernel's sigmoid (pl.reciprocal(..., approx=True)); everything else is
    # exact fp32 and matches to ~1e-6.
    assert jnp.allclose(out, ref, rtol=2e-2, atol=1e-3), (out, ref)

    print("KERNEL_OK")
</pallas_src>

<mosaic_0001>
module attributes {stable_mosaic.version = 11 : i64} {
  func.func @_bce_focal_2way_kernel(%arg0: i32, %arg1: memref<2x32xf32, #tpu.memory_space<vmem>>, %arg2: memref<2x32xf32, #tpu.memory_space<vmem>>, %arg3: memref<2x8x32xf32, #tpu.memory_space<vmem>>, %arg4: memref<1x1xf32, #tpu.memory_space<smem>>, %arg5: memref<2x32xf32, #tpu.memory_space<vmem>>, %arg6: memref<1xf32, #tpu.memory_space<smem>>) attributes {dimension_semantics = [#tpu.dimension_semantics<arbitrary>], iteration_bounds = array<i64: 1>, scalar_prefetch = 0 : i64, scratch_operands = 2 : i64, tpu.core_type = #tpu.core_type<tc>, window_params = [{pipeline_mode = #tpu.pipeline_mode<synchronous>, transform_indices = @transform_0, window_bounds = array<i64: 2, 32>}, {pipeline_mode = #tpu.pipeline_mode<synchronous>, transform_indices = @transform_1, window_bounds = array<i64: 2, 32>}, {transform_indices = @transform_2, window_bounds = array<i64: 2, 8, 32>}, {transform_indices = @transform_3, window_bounds = array<i64: 1, 1>}]} {
    %c0_i32 = arith.constant 0 : i32
    %0 = arith.cmpi eq, %arg0, %c0_i32 : i32
    %1 = arith.extui %0 : i1 to i32
    %c0_i32_0 = arith.constant 0 : i32
    %2 = arith.cmpi ne, %1, %c0_i32_0 : i32
    scf.if %2 {
      %cst_9 = arith.constant 0xFF800000 : f32
      %11 = vector.broadcast %cst_9 : f32 to vector<2x32xf32>
      %c0_10 = arith.constant 0 : index
      %c0_11 = arith.constant 0 : index
      %12 = vector.load %arg5[%c0_10, %c0_11] : memref<2x32xf32, #tpu.memory_space<vmem>>, vector<2x32xf32>
      tpu.vector_store %arg5[%c0_10, %c0_11], %11 {strides = array<i32>} : memref<2x32xf32, #tpu.memory_space<vmem>>, vector<2x32xf32>,
      %c0_12 = arith.constant 0 : index
      %c0_13 = arith.constant 0 : index
      %13 = vector.load %arg1[%c0_12, %c0_13] : memref<2x32xf32, #tpu.memory_space<vmem>>, vector<2x32xf32>
      %c0_14 = arith.constant 0 : index
      %c0_15 = arith.constant 0 : index
      %14 = vector.load %arg2[%c0_14, %c0_15] : memref<2x32xf32, #tpu.memory_space<vmem>>, vector<2x32xf32>
      %15 = math.absf %13 : vector<2x32xf32>
      %cst_16 = arith.constant 0.000000e+00 : f32
      %16 = vector.broadcast %cst_16 : f32 to vector<2x32xf32>
      %17 = arith.subf %16, %15 : vector<2x32xf32>
      %18 = math.exp %17 : vector<2x32xf32>
      %cst_17 = arith.constant 1.000000e+00 : f32
      %19 = vector.broadcast %cst_17 : f32 to vector<2x32xf32>
      %20 = arith.addf %19, %18 : vector<2x32xf32>
      %21 = math.log %20 : vector<2x32xf32>
      %cst_18 = arith.constant 0.000000e+00 : f32
      %22 = vector.broadcast %cst_18 : f32 to vector<2x32xf32>
      %23 = arith.maximumf %13, %22 : vector<2x32xf32>
      %24 = arith.mulf %13, %14 : vector<2x32xf32>
      %25 = arith.subf %23, %24 : vector<2x32xf32>
      %26 = arith.addf %25, %21 : vector<2x32xf32>
      %cst_19 = arith.constant 1.000000e+00 : f32
      %27 = vector.broadcast %cst_19 : f32 to vector<2x32xf32>
      %28 = arith.addf %27, %18 : vector<2x32xf32>
      %29 = tpu.reciprocal %28 {approx = true} : vector<2x32xf32> -> vector<2x32xf32>
      %cst_20 = arith.constant 0.000000e+00 : f32
      %30 = vector.broadcast %cst_20 : f32 to vector<2x32xf32>
      %31 = arith.cmpf oge, %13, %30 : vector<2x32xf32>
      %32 = arith.mulf %18, %29 : vector<2x32xf32>
      %33 = arith.select %31, %29, %32 : vector<2x32xi1>, vector<2x32xf32>
      %cst_21 = arith.constant 1.000000e+00 : f32
      %34 = vector.broadcast %cst_21 : f32 to vector<2x32xf32>
      %35 = arith.subf %34, %33 : vector<2x32xf32>
      %cst_22 = arith.constant 2.500000e-01 : f32
      %36 = vector.broadcast %cst_22 : f32 to vector<2x32xf32>
      %37 = arith.mulf %14, %36 : vector<2x32xf32>
      %38 = arith.mulf %35, %35 : vector<2x32xf32>
      %39 = arith.mulf %37, %38 : vector<2x32xf32>
      %cst_23 = arith.constant 1.000000e+00 : f32
      %40 = vector.broadcast %cst_23 : f32 to vector<2x32xf32>
      %41 = arith.subf %40, %14 : vector<2x32xf32>
      %42 = arith.mulf %33, %33 : vector<2x32xf32>
      %43 = arith.mulf %41, %42 : vector<2x32xf32>
      %44 = arith.addf %39, %43 : vector<2x32xf32>
      %45 = arith.mulf %44, %26 : vector<2x32xf32>
      %46 = vector.shape_cast %45 : vector<2x32xf32> to vector<1x2x32xf32>
      %cst_24 = arith.constant dense<0.000000e+00> : vector<1xf32>
      %47 = vector.multi_reduction <add>, %46, %cst_24 [1, 2] : vector<1x2x32xf32> to vector<1xf32>
      %48 = vector.shape_cast %47 : vector<1xf32> to vector<1x1x1xf32>
      %49 = vector.extract %48[0, 0, 0] : f32 from vector<1x1x1xf32>
      %c0_25 = arith.constant 0 : index
      %50 = memref.load %arg6[%c0_25] : memref<1xf32, #tpu.memory_space<smem>>
      memref.store %49, %arg6[%c0_25] : memref<1xf32, #tpu.memory_space<smem>>
    } else {
    }
    %c0 = arith.constant 0 : index
    %c0_1 = arith.constant 0 : index
    %3 = vector.load %arg5[%c0, %c0_1] : memref<2x32xf32, #tpu.memory_space<vmem>>, vector<2x32xf32>
    %c0_2 = arith.constant 0 : index
    %c0_3 = arith.constant 0 : index
    %c0_4 = arith.constant 0 : index
    %4 = vector.load %arg3[%c0_2, %c0_3, %c0_4] : memref<2x8x32xf32, #tpu.memory_space<vmem>>, vector<2x8x32xf32>
    %cst = arith.constant dense<0xFF800000> : vector<2x32xf32>
    %5 = vector.multi_reduction <maximumf>, %4, %cst [1] : vector<2x8x32xf32> to vector<2x32xf32>
    %6 = arith.maximumf %3, %5 : vector<2x32xf32>
    %c0_5 = arith.constant 0 : index
    %c0_6 = arith.constant 0 : index
    %7 = vector.load %arg5[%c0_5, %c0_6] : memref<2x32xf32, #tpu.memory_space<vmem>>, vector<2x32xf32>
    tpu.vector_store %arg5[%c0_5, %c0_6], %6 {strides = array<i32>} : memref<2x32xf32, #tpu.memory_space<vmem>>, vector<2x32xf32>,
    %c0_i32_7 = arith.constant 0 : i32
    %8 = arith.cmpi eq, %arg0, %c0_i32_7 : i32
    %9 = arith.extui %8 : i1 to i32
    %c0_i32_8 = arith.constant 0 : i32
    %10 = arith.cmpi ne, %9, %c0_i32_8 : i32
    scf.if %10 {
      %c0_9 = arith.constant 0 : index
      %c0_10 = arith.constant 0 : index
      %11 = vector.load %arg5[%c0_9, %c0_10] : memref<2x32xf32, #tpu.memory_space<vmem>>, vector<2x32xf32>
      %c0_11 = arith.constant 0 : index
      %c0_12 = arith.constant 0 : index
      %12 = vector.load %arg2[%c0_11, %c0_12] : memref<2x32xf32, #tpu.memory_space<vmem>>, vector<2x32xf32>
      %13 = math.absf %11 : vector<2x32xf32>
      %cst_13 = arith.constant 0.000000e+00 : f32
      %14 = vector.broadcast %cst_13 : f32 to vector<2x32xf32>
      %15 = arith.subf %14, %13 : vector<2x32xf32>
      %16 = math.exp %15 : vector<2x32xf32>
      %cst_14 = arith.constant 1.000000e+00 : f32
      %17 = vector.broadcast %cst_14 : f32 to vector<2x32xf32>
      %18 = arith.addf %17, %16 : vector<2x32xf32>
      %19 = math.log %18 : vector<2x32xf32>
      %cst_15 = arith.constant 0.000000e+00 : f32
      %20 = vector.broadcast %cst_15 : f32 to vector<2x32xf32>
      %21 = arith.maximumf %11, %20 : vector<2x32xf32>
      %22 = arith.mulf %11, %12 : vector<2x32xf32>
      %23 = arith.subf %21, %22 : vector<2x32xf32>
      %24 = arith.addf %23, %19 : vector<2x32xf32>
      %cst_16 = arith.constant 1.000000e+00 : f32
      %25 = vector.broadcast %cst_16 : f32 to vector<2x32xf32>
      %26 = arith.addf %25, %16 : vector<2x32xf32>
      %27 = tpu.reciprocal %26 {approx = true} : vector<2x32xf32> -> vector<2x32xf32>
      %cst_17 = arith.constant 0.000000e+00 : f32
      %28 = vector.broadcast %cst_17 : f32 to vector<2x32xf32>
      %29 = arith.cmpf oge, %11, %28 : vector<2x32xf32>
      %30 = arith.mulf %16, %27 : vector<2x32xf32>
      %31 = arith.select %29, %27, %30 : vector<2x32xi1>, vector<2x32xf32>
      %cst_18 = arith.constant 1.000000e+00 : f32
      %32 = vector.broadcast %cst_18 : f32 to vector<2x32xf32>
      %33 = arith.subf %32, %31 : vector<2x32xf32>
      %cst_19 = arith.constant 2.500000e-01 : f32
      %34 = vector.broadcast %cst_19 : f32 to vector<2x32xf32>
      %35 = arith.mulf %12, %34 : vector<2x32xf32>
      %36 = arith.mulf %33, %33 : vector<2x32xf32>
      %37 = arith.mulf %35, %36 : vector<2x32xf32>
      %cst_20 = arith.constant 1.000000e+00 : f32
      %38 = vector.broadcast %cst_20 : f32 to vector<2x32xf32>
      %39 = arith.subf %38, %12 : vector<2x32xf32>
      %40 = arith.mulf %31, %31 : vector<2x32xf32>
      %41 = arith.mulf %39, %40 : vector<2x32xf32>
      %42 = arith.addf %37, %41 : vector<2x32xf32>
      %43 = arith.mulf %42, %24 : vector<2x32xf32>
      %44 = vector.shape_cast %43 : vector<2x32xf32> to vector<1x2x32xf32>
      %cst_21 = arith.constant dense<0.000000e+00> : vector<1xf32>
      %45 = vector.multi_reduction <add>, %44, %cst_21 [1, 2] : vector<1x2x32xf32> to vector<1xf32>
      %46 = vector.shape_cast %45 : vector<1xf32> to vector<1x1x1xf32>
      %47 = vector.extract %46[0, 0, 0] : f32 from vector<1x1x1xf32>
      %c0_22 = arith.constant 0 : index
      %48 = memref.load %arg6[%c0_22] : memref<1xf32, #tpu.memory_space<smem>>
      %cst_23 = arith.constant 1.000000e+00 : f32
      %49 = arith.mulf %cst_23, %48 : f32
      %cst_24 = arith.constant 1.000000e+00 : f32
      %50 = arith.mulf %cst_24, %47 : f32
      %51 = arith.addf %49, %50 : f32
      %cst_25 = arith.constant 1.562500e-02 : f32
      %52 = arith.mulf %51, %cst_25 : f32
      %c0_26 = arith.constant 0 : index
      %c0_27 = arith.constant 0 : index
      %53 = memref.load %arg4[%c0_26, %c0_27] : memref<1x1xf32, #tpu.memory_space<smem>>
      memref.store %52, %arg4[%c0_26, %c0_27] : memref<1x1xf32, #tpu.memory_space<smem>>
    } else {
    }
    return
  }
  func.func @transform_0(%arg0: i32) -> (i32, i32) {
    %c0_i32 = arith.constant 0 : i32
    %c0_i32_0 = arith.constant 0 : i32
    %c0_i32_1 = arith.constant 0 : i32
    return %c0_i32, %c0_i32_0 : i32, i32
  }
  func.func @transform_1(%arg0: i32) -> (i32, i32) {
    %c0_i32 = arith.constant 0 : i32
    %c0_i32_0 = arith.constant 0 : i32
    %c0_i32_1 = arith.constant 0 : i32
    return %c0_i32, %c0_i32_0 : i32, i32
  }
  func.func @transform_2(%arg0: i32) -> (i32, i32, i32) {
    %c0_i32 = arith.constant 0 : i32
    %c0_i32_0 = arith.constant 0 : i32
    %c0_i32_1 = arith.constant 0 : i32
    return %c0_i32, %arg0, %c0_i32_0 : i32, i32, i32
  }
  func.func @transform_3(%arg0: i32) -> (i32, i32) {
    %c0_i32 = arith.constant 0 : i32
    %c0_i32_0 = arith.constant 0 : i32
    %c0_i32_1 = arith.constant 0 : i32
    return %c0_i32, %c0_i32_0 : i32, i32
  }
}

</mosaic_0001>

<llo_original>
// kernel: tpu_custom_call.1
$region0: #{tpu_custom_call.1}
  #allocation0 [shape = 'u32[]', space=smem, size = 0x4, offset = 0x4, fixed_abs, tag = 'smem constant byte address 0x4 - core index']
  #allocation1 [shape = 'u32[144,128]{1,0:T(1,128)}', space=vmem, size = 0x12000, scoped, tag = 'internal scratch']
  #allocation2 [shape = 'f32[2,32]{1,0:T(2,128)}', space=vmem, size = 0x400, scoped, tag = 'scratch operand']
  #allocation3 [shape = 'f32[1]{0:T(128)}', space=smem, size = 0x200, scoped, tag = 'scratch operand']
  %s0 = inlined_call_operand.hbm [shape: f32[2,32], index: 0, kind: input, shape index: {}]
  %s1 = inlined_call_operand.hbm [shape: f32[2,32], index: 1, kind: input, shape index: {}]
  %s2 = inlined_call_operand.hbm [shape: f32[2,8,32], index: 2, kind: input, shape index: {}]
  %s3 = inlined_call_operand.hbm [shape: f32[1,1], index: 3, kind: output, shape index: {}]
  %s4 = sld [smem:[#allocation0]]
  $region42: #{tpu_custom_call.1} parent=0
    _
  %s6 = ssub.s32 1, %s4
  %s7 = scalar_select 0, %s6, %s4
  $region1: #{tpu_custom_call.1} parent=0
    #allocation4 [shape = 'u8[1024]{0}', space=vmem, size = 0x400, scoped, tag = 'input window, operand 0, single buffered']
    #allocation5 [shape = 's32[1]{0}', space=sflag, size = 0x4, scoped, tag = 'scoped memory for tpu_custom_call.1']
    #allocation6 [shape = 's32[1]{0}', space=sflag, size = 0x4, scoped, tag = 'scoped memory for tpu_custom_call.1']
    #allocation7 [shape = 'u8[1024]{0}', space=vmem, size = 0x400, scoped, tag = 'input window, operand 1, single buffered']
    #allocation8 [shape = 's32[1]{0}', space=sflag, size = 0x4, scoped, tag = 'scoped memory for tpu_custom_call.1']
    #allocation9 [shape = 'u8[8192]{0}', space=vmem, size = 0x2000, scoped, tag = 'input window, operand 2, single buffered']
    #allocation10 [shape = 'u8[512]{0}', space=smem, size = 0x200, scoped, tag = 'output window, operand 0, single buffered']
    %8 = vsyncpa [#allocation5], 0
    %9 = vsyncpa [#allocation8], 0
    %10 = vsyncpa [#allocation6], 0
    // Predicated region
    $region2: #{tpu_custom_call.1} parent=1 // pred_check
      _
    $region3: #{tpu_custom_call.1} parent=1 // pred_check_branch
      %12 = sbr.rel (0) target = $region5
    $region4: #{tpu_custom_call.1} parent=1 // pred_region
      %s14 = ssub.s32 32, 32
      %15 = vsyncadd [#allocation5], %s14
      %s17 = sshll.u32 [#allocation4], 4
      %s18 = int_to_ptr.vmem [resolvable:$true] %s17
      %20 = dma.hbm_to_vmem [thread:$0]  %s0, 32, %s18, [#allocation5]
    $region5: #{tpu_custom_call.1} parent=1 // pred_fallthru
      _
    // Predicated region
    $region6: #{tpu_custom_call.1} parent=1 // pred_check
      _
    $region7: #{tpu_custom_call.1} parent=1 // pred_check_branch
      %22 = sbr.rel (0) target = $region9
    $region8: #{tpu_custom_call.1} parent=1 // pred_region
      %s24 = ssub.s32 32, 32
      %25 = vsyncadd [#allocation8], %s24
      %s27 = sshll.u32 [#allocation7], 4
      %s28 = int_to_ptr.vmem [resolvable:$true] %s27
      %30 = dma.hbm_to_vmem [thread:$0]  %s1, 32, %s28, [#allocation8]
    $region9: #{tpu_custom_call.1} parent=1 // pred_fallthru
      _
    // Predicated region
    $region10: #{tpu_custom_call.1} parent=1 // pred_check
      _
    $region11: #{tpu_custom_call.1} parent=1 // pred_check_branch
      %32 = sbr.rel (0) target = $region13
    $region12: #{tpu_custom_call.1} parent=1 // pred_region
      %s34 = ssub.s32 256, 256
      %35 = vsyncadd [#allocation8], %s34
      %s36 = sshll.u32 [#allocation9], 4
      %s37 = int_to_ptr.vmem [resolvable:$true] %s36
      %42 = dma.hbm_to_vmem [thread:$0]  %s2, 256, %s37, [#allocation8], 128, 128, 8
    $region13: #{tpu_custom_call.1} parent=1 // pred_fallthru
      _
    // Predicated region
    $region14: #{tpu_custom_call.1} parent=1 // pred_check
      _
    $region15: #{tpu_custom_call.1} parent=1 // pred_check_branch
      %44 = sbr.rel (0) target = $region17
    $region16: #{tpu_custom_call.1} parent=1 // pred_region
      %45 = dma.done [#allocation5], 32
    $region17: #{tpu_custom_call.1} parent=1 // pred_fallthru
      _
    // Predicated region
    $region18: #{tpu_custom_call.1} parent=1 // pred_check
      _
    $region19: #{tpu_custom_call.1} parent=1 // pred_check_branch
      %47 = sbr.rel (0) target = $region21
    $region20: #{tpu_custom_call.1} parent=1 // pred_region
      %48 = dma.done [#allocation8], 32
    $region21: #{tpu_custom_call.1} parent=1 // pred_fallthru
      _
    // Predicated region
    $region22: #{tpu_custom_call.1} parent=1 // pred_check
      _
    $region23: #{tpu_custom_call.1} parent=1 // pred_check_branch
      %50 = sbr.rel (0) target = $region25
    $region24: #{tpu_custom_call.1} parent=1 // pred_region
      %51 = dma.done [#allocation8], 256
    $region25: #{tpu_custom_call.1} parent=1 // pred_fallthru
      _
    %p52 = scmp.eq.s32.totalorder 0, 0
    // Predicated region
    $region26: #{tpu_custom_call.1} parent=1 // pred_check
      %p53 = pneg %p52
    $region27: #{tpu_custom_call.1} parent=1 // pred_check_branch
      %55 = sbr.rel (%p53) target = $region29
    $region28: #{tpu_custom_call.1} parent=1 // pred_region
      %vm56 = vcmask 254976
      %57 = vst.msk [vmem:[#allocation2] sm:$0x3] %vm56, -inf
      %v58 = vld [vmem:[#allocation4] sm:$0x3]
      %v59 = vld [vmem:[#allocation7] sm:$0x3]
      %v60 = vand.u32 2147483647, %v58
      %v61 = vsub.f32 0.0, %v60
      %v62 = vmul.f32 %v61, 1.442695
      %v63 = vpow.pop %v62
      %v64 = vadd.f32 %v63, 1.0
      %v65 = vlog2.pop %v64
      %v66 = vmul.f32 %v65, 0.6931472
      %v67 = vmax.f32 %v58, 0.0
      %v68 = vmul.f32 %v58, %v59
      %v69 = vsub.f32 %v67, %v68
      %v70 = vadd.f32 %v69, %v66
      %v71 = vrcp.pop %v64
      %vm72 = vcmp.ge.f32.partialorder %v58, 0.0
      %v73 = vmul.f32 %v63, %v71
      %v74 = vsel %vm72, %v71, %v73
      %v75 = vsub.f32 1.0, %v74
      %v76 = vmul.f32 %v59, 0.25
      %v77 = vmul.f32 %v75, %v75
      %v78 = vmul.f32 %v76, %v77
      %v79 = vsub.f32 1.0, %v59
      %v80 = vmul.f32 %v74, %v74
      %v81 = vmul.f32 %v79, %v80
      %v82 = vadd.f32 %v78, %v81
      %v83 = vmul.f32 %v82, %v70
      %v84 = vsel %vm56, %v83, 0.0
      %85 = vadd.xlane.f32.xlu0 %v84
      %v86 = vpop.xlane.xlu0 %85
      %v87 = vrot.slane %v86, 4
      %v88 = vadd.f32 %v86, %v87
      %v89 = vrot.slane %v88, 2
      %v90 = vadd.f32 %v88, %v89
      %v91 = vrot.slane %v90, 1
      %v92 = vadd.f32 %v90, %v91
      %s93 = vtos %v92
      %s94 = scalar_lea.smem [#allocation3], 0
      %95 = sst [smem:[%s94]] %s93
    $region29: #{tpu_custom_call.1} parent=1 // pred_fallthru
      _
    %v96 = vld [vmem:[#allocation2] sm:$0x3]
    %v97 = vld [vmem:[#allocation9] sm:$0xff]
    %v98 = vld [vmem:[#allocation9 + $0x8] sm:$0xff]
    %vm99 = vcmask 261120
    %v100 = vsel %vm99, %v97, -inf
    %v101 = vrot.slane %v100, 4
    %v102 = vmax.f32 %v100, %v101
    %v103 = vrot.slane %v102, 2
    %v104 = vmax.f32 %v102, %v103
    %v105 = vrot.slane %v104, 1
    %v106 = vmax.f32 %v104, %v105
    %v107 = vsel %vm99, %v98, -inf
    %v108 = vrot.slane %v107, 4
    %v109 = vmax.f32 %v107, %v108
    %v110 = vrot.slane %v109, 2
    %v111 = vmax.f32 %v109, %v110
    %v112 = vrot.slane %v111, 1
    %v113 = vmax.f32 %v111, %v112
    %vm116 = vcmask 1041409
    %v117 = vsel %vm116, %v113, %v106
    %v119 = vmax.f32 %v96, %v117
    %vm120 = vcmask 254976
    %121 = vst.msk [vmem:[#allocation2] sm:$0x3] %vm120, %v119
    // Predicated region
    $region30: #{tpu_custom_call.1} parent=1 // pred_check
      %p122 = pneg %p52
    $region31: #{tpu_custom_call.1} parent=1 // pred_check_branch
      %124 = sbr.rel (%p122) target = $region33
    $region32: #{tpu_custom_call.1} parent=1 // pred_region
      %v125 = vld [vmem:[#allocation2] sm:$0x3]
      %v126 = vld [vmem:[#allocation7] sm:$0x3]
      %v127 = vand.u32 2147483647, %v125
      %v128 = vsub.f32 0.0, %v127
      %v129 = vmul.f32 %v128, 1.442695
      %v130 = vpow.pop %v129
      %v131 = vadd.f32 %v130, 1.0
      %v132 = vlog2.pop %v131
      %v133 = vmul.f32 %v132, 0.6931472
      %v134 = vmax.f32 %v125, 0.0
      %v135 = vmul.f32 %v125, %v126
      %v136 = vsub.f32 %v134, %v135
      %v137 = vadd.f32 %v136, %v133
      %v138 = vrcp.pop %v131
      %vm139 = vcmp.ge.f32.partialorder %v125, 0.0
      %v140 = vmul.f32 %v130, %v138
      %v141 = vsel %vm139, %v138, %v140
      %v142 = vsub.f32 1.0, %v141
      %v143 = vmul.f32 %v126, 0.25
      %v144 = vmul.f32 %v142, %v142
      %v145 = vmul.f32 %v143, %v144
      %v146 = vsub.f32 1.0, %v126
      %v147 = vmul.f32 %v141, %v141
      %v148 = vmul.f32 %v146, %v147
      %v149 = vadd.f32 %v145, %v148
      %v150 = vmul.f32 %v149, %v137
      %v151 = vsel %vm120, %v150, 0.0
      %152 = vadd.xlane.f32.xlu0 %v151
      %v153 = vpop.xlane.xlu0 %152
      %v154 = vrot.slane %v153, 4
      %v155 = vadd.f32 %v153, %v154
      %v156 = vrot.slane %v155, 2
      %v157 = vadd.f32 %v155, %v156
      %v158 = vrot.slane %v157, 1
      %v159 = vadd.f32 %v157, %v158
      %s160 = vtos %v159
      %s161 = sld [smem:[#allocation3]]
      %s162 = sadd.f32 %s161, %s160
      %s163 = smul.f32 %s162, 0.015625
      %s164 = scalar_lea.smem [#allocation10], 0
      %165 = sst [smem:[%s164]] %s163
    $region33: #{tpu_custom_call.1} parent=1 // pred_fallthru
      _
    // Predicated region
    $region34: #{tpu_custom_call.1} parent=1 // pred_check
      _
    $region35: #{tpu_custom_call.1} parent=1 // pred_check_branch
      %167 = sbr.rel (0) target = $region37
    $region36: #{tpu_custom_call.1} parent=1 // pred_region
      %s169 = ssub.s32 16, 16
      %170 = vsyncadd [#allocation6], %s169
      %173 = dma.smem_to_hbm [#allocation10], 16, %s3, [#allocation6]
    $region37: #{tpu_custom_call.1} parent=1 // pred_fallthru
      _
    // Predicated region
    $region38: #{tpu_custom_call.1} parent=1 // pred_check
      _
    $region39: #{tpu_custom_call.1} parent=1 // pred_check_branch
      %175 = sbr.rel (0) target = $region41
    $region40: #{tpu_custom_call.1} parent=1 // pred_region
      %176 = dma.done [#allocation6], 16
    $region41: #{tpu_custom_call.1} parent=1 // pred_fallthru
      _
    %177 = sfence
    %178 = vsyncpa [#allocation5], 1
    %179 = vsyncpa [#allocation8], 1
    %180 = vsyncpa [#allocation6], 1

</llo_original>
